<compile_context>
chip_gen: v6e
topology: v6e:2x2x1
jax: 0.10.0
libtpu: 0.0.40
codegen_flags: <defaults>
</compile_context>

<pallas_src>
import jax
import jax.numpy as jnp
from jax.experimental import pallas as pl
from jax.experimental.pallas import tpu as pltpu


def _encoder_embedding_kernel(ids_ref, tab_ref, out_ref):
    """Fused gather-and-sum for a tile of output rows.

    ids_ref : (TR, 3) int32  -- per row: [content_id, Nc+part_id, Nc+Np+seq_pos]
    tab_ref : (K, D) float32 -- fused [content ; part ; position] table
    out_ref : (TR, D) float32 -- content + part + pos for these rows
    """
    rows = out_ref.shape[0]
    K = tab_ref.shape[0]

    ids = ids_ref[...]                                            # (TR, 3)

    # Column index along the fused-table axis, standard (M, K) orientation so
    # the matmul below is a plain (M,K)@(K,N) (no transposed LHS).
    col = jax.lax.broadcasted_iota(jnp.int32, (rows, K), dimension=1)
    three_hot = (
        (col == ids[:, 0:1]) | (col == ids[:, 1:2]) | (col == ids[:, 2:3])
    ).astype(jnp.float32)                                         # (TR, K)

    # Single MXU matmul = content + part + position, gathered and summed.
    out_ref[...] = jnp.dot(three_hot, tab_ref[...],
                           preferred_element_type=jnp.float32)


def encoder_embedding(content_id, part_id, pos_tab, content_tab, part_tab,
                      *, row_tile=512):
    """Pallas forward of EncoderEmbedding: pos + content_emb + part_emb."""
    B, S = content_id.shape
    S_pos, D = pos_tab.shape
    assert S == S_pos, "content_id sequence length must equal seq_len"
    Nc = content_tab.shape[0]
    Np = part_tab.shape[0]
    R = B * S
    K = Nc + Np + S

    # Fused embedding table: content rows, then part rows, then position rows.
    fused_tab = jnp.concatenate(
        [content_tab.astype(jnp.float32),
         part_tab.astype(jnp.float32),
         pos_tab.astype(jnp.float32)], axis=0)                    # (K, D)

    # Per-row indices into the fused table, packed into one int32 array so a
    # single DMA carries all ids (wrapper-side index plumbing only).
    cid = content_id.reshape(R).astype(jnp.int32)
    pid = part_id.reshape(R).astype(jnp.int32) + Nc
    sid = jnp.tile(jnp.arange(S, dtype=jnp.int32), B) + (Nc + Np)
    ids = jnp.stack([cid, pid, sid], axis=1)                      # (R, 3)

    # Collapse the batch/seq grid: one step handles all rows when they fit;
    # only very large B*S is tiled (row_tile is a multiple of 8 sublanes).
    if R <= row_tile or R % row_tile != 0:
        tr = R
    else:
        tr = row_tile
    grid = (R // tr,)

    out_flat = pl.pallas_call(
        _encoder_embedding_kernel,
        out_shape=jax.ShapeDtypeStruct((R, D), jnp.float32),
        grid=grid,
        in_specs=[
            pl.BlockSpec((tr, 3), lambda i: (i, 0)),   # packed row ids
            # Fused table is grid-invariant; stays resident in VMEM across
            # row tiles.  (For large vocabularies use HBM-resident tables +
            # DMA row gathers instead of a resident one-hot matmul.)
            pl.BlockSpec((K, D), lambda i: (0, 0)),
        ],
        out_specs=pl.BlockSpec((tr, D), lambda i: (i, 0)),
        compiler_params=pltpu.CompilerParams(
            dimension_semantics=("parallel",)),
    )(ids, fused_tab)

    return out_flat.reshape(B, S, D)


if __name__ == "__main__":
    # Small shapes consistent with the module.  D = 128 keeps the output
    # stores lane-dense (realistic SAINT n_dims is a multiple of 128 too).
    B, S, D = 2, 8, 128
    n_content, n_part = 16, 8

    key = jax.random.PRNGKey(0)
    k_pos, k_con, k_par, k_cid, k_pid = jax.random.split(key, 5)

    # nn.Embedding default init: N(0, 1)
    pos_tab = jax.random.normal(k_pos, (S, D), dtype=jnp.float32)
    content_tab = jax.random.normal(k_con, (n_content, D), dtype=jnp.float32)
    part_tab = jax.random.normal(k_par, (n_part, D), dtype=jnp.float32)

    content_id = jax.random.randint(k_cid, (B, S), 0, n_content, dtype=jnp.int32)
    part_id = jax.random.randint(k_pid, (B, S), 0, n_part, dtype=jnp.int32)

    out = encoder_embedding(content_id, part_id, pos_tab, content_tab, part_tab)
    out = jax.block_until_ready(out)

    # Pure-JAX reference (same semantics as the PyTorch forward).
    ref = (pos_tab[None, :, :]
           + jnp.take(content_tab, content_id, axis=0)
           + jnp.take(part_tab, part_id, axis=0))
    assert out.shape == (B, S, D)
    assert jnp.allclose(out, ref, atol=1e-5, rtol=1e-5)

    print("KERNEL_OK")
</pallas_src>

<mosaic_0001>
module attributes {stable_mosaic.version = 11 : i64} {
  func.func @_encoder_embedding_kernel(%arg0: i32, %arg1: memref<16x3xi32, #tpu.memory_space<vmem>>, %arg2: memref<32x128xf32, #tpu.memory_space<vmem>>, %arg3: memref<16x128xf32, #tpu.memory_space<vmem>>) attributes {dimension_semantics = [#tpu.dimension_semantics<parallel>], iteration_bounds = array<i64: 1>, scalar_prefetch = 0 : i64, scratch_operands = 0 : i64, tpu.core_type = #tpu.core_type<tc>, window_params = [{transform_indices = @transform_0, window_bounds = array<i64: 16, 3>}, {pipeline_mode = #tpu.pipeline_mode<synchronous>, transform_indices = @transform_1, window_bounds = array<i64: 32, 128>}, {transform_indices = @transform_2, window_bounds = array<i64: 16, 128>}]} {
    %c0 = arith.constant 0 : index
    %c0_0 = arith.constant 0 : index
    %0 = vector.load %arg1[%c0, %c0_0] : memref<16x3xi32, #tpu.memory_space<vmem>>, vector<16x3xi32>
    %1 = tpu.iota {dimensions = array<i32: 1>} : vector<16x32xi32>
    %2 = vector.extract_strided_slice %0 {offsets = [0, 0], sizes = [16, 1], strides = [1, 1]} : vector<16x3xi32> to vector<16x1xi32>
    %3 = vector.broadcast %2 : vector<16x1xi32> to vector<16x32xi32>
    %4 = arith.cmpi eq, %1, %3 : vector<16x32xi32>
    %5 = vector.extract_strided_slice %0 {offsets = [0, 1], sizes = [16, 1], strides = [1, 1]} : vector<16x3xi32> to vector<16x1xi32>
    %6 = vector.broadcast %5 : vector<16x1xi32> to vector<16x32xi32>
    %7 = arith.cmpi eq, %1, %6 : vector<16x32xi32>
    %8 = arith.ori %4, %7 : vector<16x32xi1>
    %9 = vector.extract_strided_slice %0 {offsets = [0, 2], sizes = [16, 1], strides = [1, 1]} : vector<16x3xi32> to vector<16x1xi32>
    %10 = vector.broadcast %9 : vector<16x1xi32> to vector<16x32xi32>
    %11 = arith.cmpi eq, %1, %10 : vector<16x32xi32>
    %12 = arith.ori %8, %11 : vector<16x32xi1>
    %13 = arith.extui %12 : vector<16x32xi1> to vector<16x32xi32>
    %14 = arith.sitofp %13 : vector<16x32xi32> to vector<16x32xf32>
    %c0_1 = arith.constant 0 : index
    %c0_2 = arith.constant 0 : index
    %15 = vector.load %arg2[%c0_1, %c0_2] : memref<32x128xf32, #tpu.memory_space<vmem>>, vector<32x128xf32>
    %cst = arith.constant dense<0.000000e+00> : vector<16x128xf32>
    %16 = tpu.matmul %14, %15, %cst {dimension_numbers = #tpu.dot_dimension_numbers<[1], [0], [0], [1], [0, 0, 1, 1], [], []>} : vector<16x32xf32>, vector<32x128xf32>, vector<16x128xf32> -> vector<16x128xf32>
    %c0_3 = arith.constant 0 : index
    %c0_4 = arith.constant 0 : index
    %17 = vector.load %arg3[%c0_3, %c0_4] : memref<16x128xf32, #tpu.memory_space<vmem>>, vector<16x128xf32>
    tpu.vector_store %arg3[%c0_3, %c0_4], %16 {strides = array<i32>} : memref<16x128xf32, #tpu.memory_space<vmem>>, vector<16x128xf32>,
    return
  }
  func.func @transform_0(%arg0: i32) -> (i32, i32) {
    %c0_i32 = arith.constant 0 : i32
    %c0_i32_0 = arith.constant 0 : i32
    return %arg0, %c0_i32 : i32, i32
  }
  func.func @transform_1(%arg0: i32) -> (i32, i32) {
    %c0_i32 = arith.constant 0 : i32
    %c0_i32_0 = arith.constant 0 : i32
    %c0_i32_1 = arith.constant 0 : i32
    return %c0_i32, %c0_i32_0 : i32, i32
  }
  func.func @transform_2(%arg0: i32) -> (i32, i32) {
    %c0_i32 = arith.constant 0 : i32
    %c0_i32_0 = arith.constant 0 : i32
    return %arg0, %c0_i32 : i32, i32
  }
}

</mosaic_0001>

<llo_original>
// kernel: tpu_custom_call.1
$region0: #{tpu_custom_call.1}
  #allocation0 [shape = 'u32[]', space=smem, size = 0x4, offset = 0x4, fixed_abs, tag = 'smem constant byte address 0x4 - core index']
  #allocation1 [shape = 'u32[144,128]{1,0:T(1,128)}', space=vmem, size = 0x12000, scoped, tag = 'internal scratch']
  %s0 = inlined_call_operand.vmem [shape: s32[16,3], index: 0, kind: input, shape index: {}]
  %s1 = inlined_call_operand.hbm [shape: f32[32,128], index: 1, kind: input, shape index: {}]
  %s2 = inlined_call_operand.hbm [shape: f32[16,128], index: 2, kind: output, shape index: {}]
  %s3 = sld [smem:[#allocation0]]
  $region22: #{tpu_custom_call.1} parent=0
    _
  %s5 = ssub.s32 1, %s3
  %s6 = scalar_select 0, %s5, %s3
  $region1: #{tpu_custom_call.1} parent=0
    #allocation2 [shape = 'u8[16384]{0}', space=vmem, size = 0x4000, scoped, tag = 'input window, operand 1, single buffered']
    #allocation3 [shape = 's32[1]{0}', space=sflag, size = 0x4, scoped, tag = 'scoped memory for tpu_custom_call.1']
    #allocation4 [shape = 's32[1]{0}', space=sflag, size = 0x4, scoped, tag = 'scoped memory for tpu_custom_call.1']
    #allocation5 [shape = 'u8[8192]{0}', space=vmem, size = 0x2000, scoped, tag = 'output window, operand 0, single buffered']
    %7 = vsyncpa [#allocation3], 0
    %8 = vsyncpa [#allocation4], 0
    // Predicated region
    $region2: #{tpu_custom_call.1} parent=1 // pred_check
      _
    $region3: #{tpu_custom_call.1} parent=1 // pred_check_branch
      %10 = sbr.rel (0) target = $region5
    $region4: #{tpu_custom_call.1} parent=1 // pred_region
      _
    $region5: #{tpu_custom_call.1} parent=1 // pred_fallthru
      _
    // Predicated region
    $region6: #{tpu_custom_call.1} parent=1 // pred_check
      _
    $region7: #{tpu_custom_call.1} parent=1 // pred_check_branch
      %12 = sbr.rel (0) target = $region9
    $region8: #{tpu_custom_call.1} parent=1 // pred_region
      %s14 = ssub.s32 512, 512
      %15 = vsyncadd [#allocation3], %s14
      %s16 = sshll.u32 [#allocation2], 4
      %s17 = int_to_ptr.vmem [resolvable:$true] %s16
      %22 = dma.hbm_to_vmem [thread:$0]  %s1, 512, %s17, [#allocation3], 128, 128, 8
    $region9: #{tpu_custom_call.1} parent=1 // pred_fallthru
      _
    // Predicated region
    $region10: #{tpu_custom_call.1} parent=1 // pred_check
      _
    $region11: #{tpu_custom_call.1} parent=1 // pred_check_branch
      %24 = sbr.rel (0) target = $region13
    $region12: #{tpu_custom_call.1} parent=1 // pred_region
      %25 = dma.done [#allocation3], 512
    $region13: #{tpu_custom_call.1} parent=1 // pred_fallthru
      _
    %v26 = vld [vmem:[%s0] sm:$0xff]
    %v27 = vld [vmem:[%s0 + $0x8] sm:$0xff]
    %v28 = vlaneseq
    %v29 = vand.u32 %v28, 127
    %30 = vset.pattern.permute.xlu0 0
    %31 = vperm.xlu0 %30, %v26
    %v32 = vpop.permute.xlu0 %31
    %33 = vset.pattern.permute.xlu0 0
    %34 = vperm.xlu0 %33, %v27
    %v35 = vpop.permute.xlu0 %34
    %vm36 = vcmp.eq.s32.totalorder %v29, %v32
    %vm37 = vcmp.eq.s32.totalorder %v29, %v35
    %38 = vset.pattern.permute.xlu0 1
    %39 = vperm.xlu0 %38, %v26
    %v40 = vpop.permute.xlu0 %39
    %41 = vset.pattern.permute.xlu0 1
    %42 = vperm.xlu0 %41, %v27
    %v43 = vpop.permute.xlu0 %42
    %vm44 = vcmp.eq.s32.totalorder %v29, %v40
    %vm45 = vcmp.eq.s32.totalorder %v29, %v43
    %vm46 = vmor %vm36, %vm44
    %vm47 = vmor %vm37, %vm45
    %48 = vset.pattern.permute.xlu0 2
    %49 = vperm.xlu0 %48, %v26
    %v50 = vpop.permute.xlu0 %49
    %51 = vset.pattern.permute.xlu0 2
    %52 = vperm.xlu0 %51, %v27
    %v53 = vpop.permute.xlu0 %52
    %vm54 = vcmp.eq.s32.totalorder %v29, %v50
    %vm55 = vcmp.eq.s32.totalorder %v29, %v53
    %vm56 = vmor %vm46, %vm54
    %vm57 = vmor %vm47, %vm55
    %v58 = vsel %vm56, 1, 0
    %v59 = vsel %vm57, 1, 0
    %v60 = vcvt.s32.f32 %v58
    %v61 = vcvt.s32.f32 %v59
    %v62 = vld [vmem:[#allocation2] sm:$0xff]
    %v63 = vld [vmem:[#allocation2 + $0x8] sm:$0xff]
    %v64 = vld [vmem:[#allocation2 + $0x10] sm:$0xff]
    %v65 = vld [vmem:[#allocation2 + $0x18] sm:$0xff]
    %vm66 = vcmask 261120
    %v68 = vsel %vm66, %v60, 0
    %v71 = vsel %vm66, %v61, 0
    %73 = vmatprep.subr.mxu0 0.0
    %74 = vmatpush1.msra.mxu0 0.0
    %75 = vmatprep.subr.mxu0 0.0
    %76 = vmatpush1.msra.mxu0 0.0
    %77 = vmatprep.subr.mxu0 0.0
    %78 = vmatpush1.msra.mxu0 0.0
    %79 = vmatprep.subr.mxu0 0.0
    %80 = vmatpush1.msra.mxu0 0.0
    %81 = vmatprep.subr.mxu0 0.0
    %82 = vmatpush1.msra.mxu0 0.0
    %83 = vmatprep.subr.mxu0 0.0
    %84 = vmatpush1.msra.mxu0 0.0
    %85 = vmatprep.subr.mxu0 0.0
    %86 = vmatpush1.msra.mxu0 0.0
    %87 = vmatprep.subr.mxu0 0.0
    %88 = vmatpush1.msra.mxu0 0.0
    %89 = vmatprep.subr.mxu0 0.0
    %90 = vmatpush1.msra.mxu0 0.0
    %91 = vmatprep.subr.mxu0 0.0
    %92 = vmatpush1.msra.mxu0 0.0
    %93 = vmatprep.subr.mxu0 0.0
    %94 = vmatpush1.msra.mxu0 0.0
    %95 = vmatprep.subr.mxu0 0.0
    %96 = vmatpush1.msra.mxu0 0.0
    %97 = vmatprep.subr.mxu0 0.0
    %98 = vmatpush1.msra.mxu0 %v65
    %99 = vmatprep.subr.mxu0 0.0
    %100 = vmatpush1.msra.mxu0 %v64
    %101 = vmatprep.subr.mxu0 0.0
    %102 = vmatpush1.msra.mxu0 %v63
    %103 = vmatprep.subr.mxu0 0.0
    %104 = vmatpush1.msra.mxu0 %v62
    %105 = vmatprep.subr.mxu0 0.0
    %106 = vmatpush2.msra.mxu0 0.0
    %107 = vmatprep.subr.mxu0 0.0
    %108 = vmatpush2.msra.mxu0 0.0
    %109 = vmatprep.subr.mxu0 0.0
    %110 = vmatpush2.msra.mxu0 0.0
    %111 = vmatprep.subr.mxu0 0.0
    %112 = vmatpush2.msra.mxu0 0.0
    %113 = vmatprep.subr.mxu0 0.0
    %114 = vmatpush2.msra.mxu0 0.0
    %115 = vmatprep.subr.mxu0 0.0
    %116 = vmatpush2.msra.mxu0 0.0
    %117 = vmatprep.subr.mxu0 0.0
    %118 = vmatpush2.msra.mxu0 0.0
    %119 = vmatprep.subr.mxu0 0.0
    %120 = vmatpush2.msra.mxu0 0.0
    %121 = vmatprep.subr.mxu0 0.0
    %122 = vmatpush2.msra.mxu0 0.0
    %123 = vmatprep.subr.mxu0 0.0
    %124 = vmatpush2.msra.mxu0 0.0
    %125 = vmatprep.subr.mxu0 0.0
    %126 = vmatpush2.msra.mxu0 0.0
    %127 = vmatprep.subr.mxu0 0.0
    %128 = vmatpush2.msra.mxu0 0.0
    %129 = vmatprep.subr.mxu0 0.0
    %130 = vmatpush2.msra.mxu0 0.0
    %131 = vmatprep.subr.mxu0 0.0
    %132 = vmatpush2.msra.mxu0 0.0
    %133 = vmatprep.subr.mxu0 0.0
    %134 = vmatpush2.msra.mxu0 0.0
    %135 = vmatprep.subr.mxu0 0.0
    %136 = vmatpush2.msra.mxu0 0.0
    %137 = vmatprep.mubr.f32.mxu0 0.0
    %138 = vmatmul.mubr.f32.gmra.mxu0 %v68
    %v139 = vpop.f32.mrf.mxu0
    %v140 = vadd.f32 0.0, %v139
    %v141 = vpop.f32.mrf.mxu0
    %142 = vmatprep.mubr.f32.mxu0 0.0
    %143 = vmatmul.mubr.f32.gmra.mxu0 %v71
    %v144 = vpop.f32.mrf.mxu0
    %v145 = vadd.f32 0.0, %v144
    %v146 = vpop.f32.mrf.mxu0
    %147 = vdwg.mxu0
    %148 = vst [vmem:[#allocation5] sm:$0xff] %v140
    %149 = vst [vmem:[#allocation5 + $0x8] sm:$0xff] %v145
    // Predicated region
    $region14: #{tpu_custom_call.1} parent=1 // pred_check
      _
    $region15: #{tpu_custom_call.1} parent=1 // pred_check_branch
      %151 = sbr.rel (0) target = $region17
    $region16: #{tpu_custom_call.1} parent=1 // pred_region
      %s153 = ssub.s32 256, 256
      %154 = vsyncadd [#allocation4], %s153
      %s155 = sshll.u32 [#allocation5], 4
      %s156 = int_to_ptr.vmem [resolvable:$true] %s155
      %161 = dma.vmem_to_hbm [thread:$0]  %s156, 256, %s2, [#allocation4], 128, 128, 8
    $region17: #{tpu_custom_call.1} parent=1 // pred_fallthru
      _
    // Predicated region
    $region18: #{tpu_custom_call.1} parent=1 // pred_check
      _
    $region19: #{tpu_custom_call.1} parent=1 // pred_check_branch
      %163 = sbr.rel (0) target = $region21
    $region20: #{tpu_custom_call.1} parent=1 // pred_region
      %164 = dma.done [#allocation4], 256
    $region21: #{tpu_custom_call.1} parent=1 // pred_fallthru
      _
    %165 = vsyncpa [#allocation3], 1
    %166 = vsyncpa [#allocation4], 1

</llo_original>
